<compile_context>
chip_gen: v5e
topology: v5e:2x2
jax: 0.10.0
libtpu: 0.0.40
codegen_flags: <defaults>
</compile_context>

<pallas_src>
import jax
import jax.numpy as jnp
import numpy as np
from jax.experimental import pallas as pl
from jax.experimental.pallas import tpu as pltpu

_LANES = 128
_TARGET_BLOCK_BYTES = 4 * 1024 * 1024   # per array per block; in+out double-buffered ~16 MiB
_VMEM_LIMIT = 32 * 1024 * 1024


def _cdiv(a, b):
    return -(-a // b)


def _round_up(a, m):
    return _cdiv(a, m) * m


def _round_down(a, m):
    return (a // m) * m


def _sublane_multiple(itemsize):
    # 32-bit packs (8,128); bf16 packs (16,128); int8/fp8 pack (32,128).
    return {4: 8, 2: 16, 1: 32}.get(itemsize, 8)


def _droppath_kernel(scale_ref, x_ref, o_ref):
    """o = x * scale[batch]; scale is (bt,1[,1]) f32 = mask / keep_prob."""
    o_ref[...] = (x_ref[...] * scale_ref[...]).astype(o_ref.dtype)


def _scaled_copy(x_view, scale_view, grid, block_x, block_s, idx_x, idx_s, donate):
    itemsize = jnp.dtype(x_view.dtype).itemsize
    n_elems = int(np.prod(x_view.shape))
    kwargs = {}
    if donate:
        # inputs are (scale, x): alias x (index 1) to the single output.
        kwargs["input_output_aliases"] = {1: 0}
    return pl.pallas_call(
        _droppath_kernel,
        out_shape=jax.ShapeDtypeStruct(x_view.shape, x_view.dtype),
        grid=grid,
        in_specs=[pl.BlockSpec(block_s, idx_s),
                  pl.BlockSpec(block_x, idx_x)],
        out_specs=pl.BlockSpec(block_x, idx_x),
        compiler_params=pltpu.CompilerParams(
            dimension_semantics=("parallel", "parallel"),
            vmem_limit_bytes=_VMEM_LIMIT),
        cost_estimate=pl.CostEstimate(
            flops=n_elems,
            transcendentals=0,
            bytes_accessed=2 * n_elems * itemsize),
        **kwargs,
    )(scale_view, x_view)


def drop_path(x, drop_prob, *, key, training=True, donate=False):
    """JAX wrapper matching DropPath.forward semantics."""
    if drop_prob is None or drop_prob == 0.0 or not training:
        return x
    keep_prob = 1.0 - float(drop_prob)
    if keep_prob <= 0.0:
        # drop_prob == 1.0: every sample dropped (avoids 0 * inf = NaN).
        return jnp.zeros_like(x)

    b = int(x.shape[0])
    d = int(np.prod(x.shape[1:]))
    itemsize = jnp.dtype(x.dtype).itemsize
    sub_mult = _sublane_multiple(itemsize)

    # Per-sample mask/scale: floor(keep_prob + U[0,1)) / keep_prob, kept in f32.
    u = jax.random.uniform(key, (b,), dtype=jnp.float32)
    scale = jnp.floor(jnp.float32(keep_prob) + u) * jnp.float32(1.0 / keep_prob)

    if d % _LANES == 0:
        # --- lane/sublane-dense (B, rows, 128) layout; reshape is free. ---
        rows = d // _LANES
        cap_rows = max(sub_mult,
                       _round_down(_TARGET_BLOCK_BYTES // (_LANES * itemsize), sub_mult))
        if rows > cap_rows:
            bt, tile_rows = 1, cap_rows
        else:
            tile_rows = rows
            per_sample = rows * _LANES * itemsize
            bt = max(1, min(b, _TARGET_BLOCK_BYTES // per_sample))
        # v7x: keep both TensorCores fed when the grid would collapse to 1 step.
        if _cdiv(b, bt) * _cdiv(rows, tile_rows) < 2:
            if b >= 2:
                bt = _cdiv(b, 2)
            elif rows > sub_mult:
                half = _round_up(_cdiv(rows, 2), sub_mult)
                if half < rows:
                    tile_rows = half
        grid = (_cdiv(b, bt), _cdiv(rows, tile_rows))
        x_view = x.reshape(b, rows, _LANES)
        out = _scaled_copy(
            x_view, scale.reshape(b, 1, 1), grid,
            (bt, tile_rows, _LANES), (bt, 1, 1),
            lambda i, j: (i, j, 0), lambda i, j: (i, 0, 0), donate)
    else:
        # --- 2-D (B, D) layout; the single partial 128-lane edge block is ---
        # --- masked by Pallas (no pad / slice passes over HBM).           ---
        if d <= _LANES:
            ct = d
        else:
            max_ct = max(_LANES,
                         _round_down(_TARGET_BLOCK_BYTES // (8 * itemsize), _LANES))
            ct = min(_round_down(d, _LANES), max_ct)
        if b <= 8:
            bt = b  # equals the full batch dim -> legal block shape
        else:
            bt = min(b, max(8, _round_down(_TARGET_BLOCK_BYTES // (ct * itemsize), 8)))
        # v7x: ensure >= 2 grid steps when the shape allows it.
        if _cdiv(b, bt) * _cdiv(d, ct) < 2:
            if ct > _LANES:
                ct = max(_LANES, _round_down(_cdiv(d, 2), _LANES))
            elif b > 8:
                bt = max(8, _round_down(_cdiv(b, 2), 8))
        grid = (_cdiv(b, bt), _cdiv(d, ct))
        x_view = x.reshape(b, d)
        out = _scaled_copy(
            x_view, scale.reshape(b, 1), grid,
            (bt, ct), (bt, 1),
            lambda i, j: (i, j), lambda i, j: (i, 0), donate)

    return out.reshape(x.shape)


if __name__ == "__main__":
    root = jax.random.PRNGKey(0)
    k_data, k_mask, k_data2, k_mask2 = jax.random.split(root, 4)

    drop_prob = 0.3
    keep_prob = 1.0 - drop_prob

    # Case 1: lane-aligned features (d = 4*16*16 = 1024, multiple of 128).
    x = jax.random.normal(k_data, (2, 4, 16, 16), dtype=jnp.float32)
    out = jax.block_until_ready(drop_path(x, drop_prob, key=k_mask, training=True))
    x_np, out_np = np.asarray(x), np.asarray(out)
    for i in range(x_np.shape[0]):
        ok = (np.allclose(out_np[i], 0.0) or
              np.allclose(out_np[i], x_np[i] / keep_prob, rtol=1e-5, atol=1e-5))
        assert ok, "per-sample mask semantics violated (aligned path)"

    # Case 2: misaligned features (d = 2*10*10 = 200) -> 2-D path, masked edge block.
    x2 = jax.random.normal(k_data2, (4, 2, 10, 10), dtype=jnp.float32)
    out2 = jax.block_until_ready(drop_path(x2, drop_prob, key=k_mask2, training=True))
    x2_np, out2_np = np.asarray(x2), np.asarray(out2)
    for i in range(x2_np.shape[0]):
        ok = (np.allclose(out2_np[i], 0.0) or
              np.allclose(out2_np[i], x2_np[i] / keep_prob, rtol=1e-5, atol=1e-5))
        assert ok, "per-sample mask semantics violated (misaligned path)"

    # Glue paths: eval mode / drop_prob=0 are identity; drop_prob=1 is zeros.
    out_eval = jax.block_until_ready(drop_path(x, drop_prob, key=k_mask, training=False))
    assert np.allclose(np.asarray(out_eval), x_np)
    out_p0 = jax.block_until_ready(drop_path(x, 0.0, key=k_mask, training=True))
    assert np.allclose(np.asarray(out_p0), x_np)
    out_p1 = jax.block_until_ready(drop_path(x, 1.0, key=k_mask, training=True))
    assert np.allclose(np.asarray(out_p1), 0.0)

    print("KERNEL_OK")
</pallas_src>

<mosaic_0001>
module attributes {stable_mosaic.version = 11 : i64} {
  func.func @_droppath_kernel(%arg0: i32, %arg1: i32, %arg2: memref<1x1x1xf32, #tpu.memory_space<vmem>>, %arg3: memref<1x8x128xf32, #tpu.memory_space<vmem>>, %arg4: memref<1x8x128xf32, #tpu.memory_space<vmem>>) attributes {dimension_semantics = [#tpu.dimension_semantics<parallel>, #tpu.dimension_semantics<parallel>], iteration_bounds = array<i64: 2, 1>, scalar_prefetch = 0 : i64, scratch_operands = 0 : i64, tpu.core_type = #tpu.core_type<tc>, window_params = [{transform_indices = @transform_0, window_bounds = array<i64: 1, 1, 1>}, {transform_indices = @transform_1, window_bounds = array<i64: 1, 8, 128>}, {transform_indices = @transform_2, window_bounds = array<i64: 1, 8, 128>}]} {
    %c0 = arith.constant 0 : index
    %c0_0 = arith.constant 0 : index
    %c0_1 = arith.constant 0 : index
    %0 = vector.load %arg3[%c0, %c0_0, %c0_1] : memref<1x8x128xf32, #tpu.memory_space<vmem>>, vector<1x8x128xf32>
    %c0_2 = arith.constant 0 : index
    %c0_3 = arith.constant 0 : index
    %c0_4 = arith.constant 0 : index
    %1 = vector.load %arg2[%c0_2, %c0_3, %c0_4] : memref<1x1x1xf32, #tpu.memory_space<vmem>>, vector<1x1x1xf32>
    %2 = vector.broadcast %1 : vector<1x1x1xf32> to vector<1x8x128xf32>
    %3 = arith.mulf %0, %2 : vector<1x8x128xf32>
    %c0_5 = arith.constant 0 : index
    %c0_6 = arith.constant 0 : index
    %c0_7 = arith.constant 0 : index
    %4 = vector.load %arg4[%c0_5, %c0_6, %c0_7] : memref<1x8x128xf32, #tpu.memory_space<vmem>>, vector<1x8x128xf32>
    tpu.vector_store %arg4[%c0_5, %c0_6, %c0_7], %3 {strides = array<i32>} : memref<1x8x128xf32, #tpu.memory_space<vmem>>, vector<1x8x128xf32>,
    return
  }
  func.func @transform_0(%arg0: i32, %arg1: i32) -> (i32, i32, i32) {
    %c0_i32 = arith.constant 0 : i32
    %c0_i32_0 = arith.constant 0 : i32
    %c0_i32_1 = arith.constant 0 : i32
    return %arg0, %c0_i32, %c0_i32_0 : i32, i32, i32
  }
  func.func @transform_1(%arg0: i32, %arg1: i32) -> (i32, i32, i32) {
    %c0_i32 = arith.constant 0 : i32
    %c0_i32_0 = arith.constant 0 : i32
    return %arg0, %arg1, %c0_i32 : i32, i32, i32
  }
  func.func @transform_2(%arg0: i32, %arg1: i32) -> (i32, i32, i32) {
    %c0_i32 = arith.constant 0 : i32
    %c0_i32_0 = arith.constant 0 : i32
    return %arg0, %arg1, %c0_i32 : i32, i32, i32
  }
}

</mosaic_0001>

<llo_original>
// kernel: tpu_custom_call.1
$region0: #{tpu_custom_call.1}
  #allocation0 [shape = 'u32[]', space=smem, size = 0x4, offset = 0x4, fixed_abs, tag = 'smem constant byte address 0x4 - core index']
  #allocation1 [shape = 'u32[72,128]{1,0:T(1,128)}', space=vmem, size = 0x9000, scoped, tag = 'internal scratch']
  %s0 = inlined_call_operand.vmem [shape: f32[2,1,1], index: 0, kind: input, shape index: {}]
  %s1 = inlined_call_operand.hbm [shape: f32[2,8,128], index: 1, kind: input, shape index: {}]
  %s2 = inlined_call_operand.hbm [shape: f32[2,8,128], index: 2, kind: output, shape index: {}]
  %s3 = sld [smem:[#allocation0]]
  $region45: #{tpu_custom_call.1} parent=0
    _
  %s5 = ssub.s32 1, %s3
  %s6 = scalar_select 0, %s5, %s3
  $region1: #{tpu_custom_call.1} parent=0
    #allocation2 [shape = 'u8[8192]{0}', space=vmem, size = 0x2000, scoped, tag = 'input window, operand 1']
    #allocation3 [shape = 's32[2]{0}', space=sflag, size = 0x8, scoped, tag = 'scoped memory for tpu_custom_call.1']
    #allocation4 [shape = 's32[2]{0}', space=sflag, size = 0x8, scoped, tag = 'scoped memory for tpu_custom_call.1']
    #allocation5 [shape = 'u8[8192]{0}', space=vmem, size = 0x2000, scoped, tag = 'output window, operand 0']
    %7 = vsyncpa [#allocation3], 0
    %s8 = scalar_lea.sflag [#allocation3], 1
    %9 = vsyncpa %s8, 0
    %10 = vsyncpa [#allocation4], 0
    %s11 = scalar_lea.sflag [#allocation4], 1
    %12 = vsyncpa %s11, 0
    loop: start=0, step=1, limit=4
    $region2: #{tpu_custom_call.1} parent=1 // loop_pre_header
      _
    $region3: #{tpu_custom_call.1} parent=1 // loop_header
      %s14 = sphi 0, %s18
      %p15 = scmp.ge.s32.totalorder %s14, 4
      %s21 = sphi 0, %s33
      %s22 = sphi 0, %s29
      %s23 = sphi 0, %s21
      %s24 = sphi 0, %s22
      %s25 = sphi 0, %s23
      %s26 = sphi 0, %s24
      %s36 = sphi 0, %s38
      %s39 = sphi 0, %s36
      %s40 = sphi 0, %s39
      %s56 = sphi 0, %s40
      %s64 = sphi 0, %s66
      %s67 = sphi 0, %s64
      %s68 = sphi 0, %s67
      %s84 = sphi 0, %s68
      %s92 = sphi 0, %s94
      %s95 = sphi 0, %s92
      %s96 = sphi 0, %s95
      %s112 = sphi 0, %s96
    $region4: #{tpu_custom_call.1} parent=1 // loop_header_branch
      %17 = sbr.rel (%p15) target = $region8
    $region5: #{tpu_custom_call.1} parent=1 // loop_body
      %s19 = ssub.s32 %s14, 1
      %s20 = ssub.s32 %s14, 2
      %s27 = sadd.s32 1, %s22
      %p28 = scmp.ge.s32.totalorder %s27, 1
      %s29 = scalar_select %p28, 0, %s27
      %s30 = sadd.s32 1, %s21
      %s31 = scalar_select %p28, %s30, %s21
      %p32 = scmp.ge.s32.totalorder %s31, 2
      %s33 = scalar_select %p32, 0, %s31
      %s34 = ssub.s32 %s21, %s33
      %p35 = scmp.eq.s32.totalorder %s34, 0
      %s37 = sadd.s32 %s36, 1
      %s38 = scalar_select %p35, %s36, %s37
      %p41 = pneg %p35
      %p42 = scmp.eq.s32.totalorder %s14, 1
      %p43 = por %p41, %p42
      %p44 = scmp.ne.s32.totalorder %s36, %s39
      %p45 = scmp.eq.s32.totalorder %s14, 0
      %p46 = por %p44, %p45
      %p47 = scmp.ne.s32.totalorder %s36, %s39
      %p48 = scmp.eq.s32.totalorder %s19, 1
      %p49 = por %p47, %p48
      %p50 = scmp.ne.s32.totalorder %s39, %s40
      %p51 = scmp.eq.s32.totalorder %s19, 0
      %p52 = por %p50, %p51
      %p53 = scmp.ne.s32.totalorder %s39, %s40
      %p54 = scmp.eq.s32.totalorder %s20, 1
      %p55 = por %p53, %p54
      %p57 = scmp.ne.s32.totalorder %s40, %s56
      %p58 = scmp.eq.s32.totalorder %s20, 0
      %p59 = por %p57, %p58
      %s60 = ssub.s32 %s21, %s33
      %s61 = ssub.s32 %s22, %s29
      %s62 = sor.u32 %s60, %s61
      %p63 = scmp.eq.s32.totalorder %s62, 0
      %s65 = sadd.s32 %s64, 1
      %s66 = scalar_select %p63, %s64, %s65
      %p69 = pneg %p63
      %p70 = scmp.eq.s32.totalorder %s14, 1
      %p71 = por %p69, %p70
      %p72 = scmp.ne.s32.totalorder %s64, %s67
      %p73 = scmp.eq.s32.totalorder %s14, 0
      %p74 = por %p72, %p73
      %p75 = scmp.ne.s32.totalorder %s64, %s67
      %p76 = scmp.eq.s32.totalorder %s19, 1
      %p77 = por %p75, %p76
      %p78 = scmp.ne.s32.totalorder %s67, %s68
      %p79 = scmp.eq.s32.totalorder %s19, 0
      %p80 = por %p78, %p79
      %p81 = scmp.ne.s32.totalorder %s67, %s68
      %p82 = scmp.eq.s32.totalorder %s20, 1
      %p83 = por %p81, %p82
      %p85 = scmp.ne.s32.totalorder %s68, %s84
      %p86 = scmp.eq.s32.totalorder %s20, 0
      %p87 = por %p85, %p86
      %s88 = ssub.s32 %s21, %s33
      %s89 = ssub.s32 %s22, %s29
      %s90 = sor.u32 %s88, %s89
      %p91 = scmp.eq.s32.totalorder %s90, 0
      %s93 = sadd.s32 %s92, 1
      %s94 = scalar_select %p91, %s92, %s93
      %p97 = pneg %p91
      %p98 = scmp.eq.s32.totalorder %s14, 1
      %p99 = por %p97, %p98
      %p100 = scmp.ne.s32.totalorder %s92, %s95
      %p101 = scmp.eq.s32.totalorder %s14, 0
      %p102 = por %p100, %p101
      %p103 = scmp.ne.s32.totalorder %s92, %s95
      %p104 = scmp.eq.s32.totalorder %s19, 1
      %p105 = por %p103, %p104
      %p106 = scmp.ne.s32.totalorder %s95, %s96
      %p107 = scmp.eq.s32.totalorder %s19, 0
      %p108 = por %p106, %p107
      %p109 = scmp.ne.s32.totalorder %s95, %s96
      %p110 = scmp.eq.s32.totalorder %s20, 1
      %p111 = por %p109, %p110
      %p113 = scmp.ne.s32.totalorder %s96, %s112
      %p114 = scmp.eq.s32.totalorder %s20, 0
      %p115 = por %p113, %p114
      %p116 = scmp.le.s32.totalorder 1, %s14
      %p117 = scmp.lt.s32.totalorder %s14, 3
      %p118 = pnand %p116, %p117
      %p119 = pneg %p118
      // Predicated region
      $region9: #{tpu_custom_call.1} parent=5 // pred_check
        _
      $region10: #{tpu_custom_call.1} parent=5 // pred_check_branch
        %121 = sbr.rel (%p118) target = $region12
      $region11: #{tpu_custom_call.1} parent=5 // pred_region
        %s122 = ssub.s32 %s14, 1
      $region12: #{tpu_custom_call.1} parent=5 // pred_fallthru
        _
      %p123 = scmp.lt.s32.totalorder %s14, 2
      // Predicated region
      $region13: #{tpu_custom_call.1} parent=5 // pred_check
        %p124 = pneg %p123
      $region14: #{tpu_custom_call.1} parent=5 // pred_check_branch
        %126 = sbr.rel (%p124) target = $region16
      $region15: #{tpu_custom_call.1} parent=5 // pred_region
        // Predicated region
        $region17: #{tpu_custom_call.1} parent=15 // pred_check
          %p127 = pneg %p46
        $region18: #{tpu_custom_call.1} parent=15 // pred_check_branch
          %129 = sbr.rel (%p127) target = $region20
        $region19: #{tpu_custom_call.1} parent=15 // pred_region
          %p130 = scmp.lt.s32.totalorder %s21, 1
          %s131 = scalar_select %p130, %s21, 1
          %s132 = scalar_lea.vmem %s0, %s131
        $region20: #{tpu_custom_call.1} parent=15 // pred_fallthru
          _
        // Predicated region
        $region21: #{tpu_custom_call.1} parent=15 // pred_check
          %p133 = pneg %p74
        $region22: #{tpu_custom_call.1} parent=15 // pred_check_branch
          %135 = sbr.rel (%p133) target = $region24
        $region23: #{tpu_custom_call.1} parent=15 // pred_region
          %s136 = sand.u32 %s64, 1
          %s137 = scalar_lea.sflag [#allocation3], %s136
          %s138 = sand.u32 %s64, 1
          %s139 = smul.addr %s138, 8
          %s140 = scalar_lea.vmem [#allocation2], %s139
          %142 = vsyncadd %s137, 0
          %s143 = sadd.s32 %s22, %s21
          %s144 = smul.addr %s143, 8
          %s145 = scalar_lea.hbm %s1, %s144
          %s147 = sshll.u32 %s145, 4
          %s148 = int_to_ptr.hbm [resolvable:$true] %s147
          %s149 = sshll.u32 %s140, 4
          %s150 = int_to_ptr.vmem [resolvable:$true] %s149
          %152 = dma.hbm_to_vmem [thread:$0]  %s148, 128, %s150, %s137
        $region24: #{tpu_custom_call.1} parent=15 // pred_fallthru
          _
      $region16: #{tpu_custom_call.1} parent=5 // pred_fallthru
        _
      %p153 = scmp.le.s32.totalorder 1, %s14
      %p154 = scmp.lt.s32.totalorder %s14, 3
      %p155 = pnand %p153, %p154
      %p156 = pneg %p155
      // Predicated region
      $region25: #{tpu_custom_call.1} parent=5 // pred_check
        _
      $region26: #{tpu_custom_call.1} parent=5 // pred_check_branch
        %158 = sbr.rel (%p155) target = $region28
      $region27: #{tpu_custom_call.1} parent=5 // pred_region
        %s159 = ssub.s32 %s14, 1
        %s160 = sand.u32 %s67, 1
        %s161 = scalar_lea.sflag [#allocation3], %s160
        %s162 = sand.u32 %s67, 1
        %s163 = smul.addr %s162, 8
        %s164 = scalar_lea.vmem [#allocation2], %s163
        // Predicated region
        $region29: #{tpu_custom_call.1} parent=27 // pred_check
          %p165 = pneg %p80
        $region30: #{tpu_custom_call.1} parent=27 // pred_check_branch
          %167 = sbr.rel (%p165) target = $region32
        $region31: #{tpu_custom_call.1} parent=27 // pred_region
          %169 = dma.done %s161, 128
        $region32: #{tpu_custom_call.1} parent=27 // pred_fallthru
          _
        %p170 = scmp.lt.s32.totalorder %s23, 1
        %s171 = scalar_select %p170, %s23, 1
        %s172 = scalar_lea.vmem %s0, %s171
        %p173 = pneg %p52
        %p174 = pneg %p49
        %s175 = sand.u32 %s67, 1
        %s176 = scalar_lea.sflag [#allocation3], %s175
        %s177 = sand.u32 %s67, 1
        %s178 = smul.addr %s177, 8
        %s179 = scalar_lea.vmem [#allocation2], %s178
        %p180 = pneg %p80
        %p181 = pneg %p77
        %p182 = pneg %p108
        %p183 = pneg %p105
        %s184 = sand.u32 %s95, 1
        %s185 = scalar_lea.sflag [#allocation4], %s184
        %s186 = sand.u32 %s95, 1
        %s187 = smul.addr %s186, 8
        %s188 = scalar_lea.vmem [#allocation5], %s187
        %p189 = scmp.lt.s32.totalorder %s23, 1
        %s190 = scalar_select %p189, %s23, 1
        %s191 = scalar_lea.vmem %s0, %s190
        %v192 = vld [vmem:[%s164] sm:$0xff]
        %v193 = vld [vmem:[%s191] sm:$0x1]
        %v195 = vperm.slane %v193, 0
        %196 = vset.pattern.permute.xlu0 0
        %197 = vperm.xlu0 %196, %v195
        %v198 = vpop.permute.xlu0 %197
        %v200 = vmul.f32 %v192, %v198
        %201 = vst [vmem:[%s188] sm:$0xff] %v200
        %s202 = sand.u32 %s95, 1
        %s203 = scalar_lea.sflag [#allocation4], %s202
        %s204 = sand.u32 %s95, 1
        %s205 = smul.addr %s204, 8
        %s206 = scalar_lea.vmem [#allocation5], %s205
        // Predicated region
        $region33: #{tpu_custom_call.1} parent=27 // pred_check
          %p207 = pneg %p105
        $region34: #{tpu_custom_call.1} parent=27 // pred_check_branch
          %209 = sbr.rel (%p207) target = $region36
        $region35: #{tpu_custom_call.1} parent=27 // pred_region
          %211 = vsyncadd %s203, 0
          %s212 = sadd.s32 %s24, %s23
          %s213 = smul.addr %s212, 8
          %s214 = scalar_lea.hbm %s2, %s213
          %s216 = sshll.u32 %s206, 4
          %s217 = int_to_ptr.vmem [resolvable:$true] %s216
          %s218 = sshll.u32 %s214, 4
          %s219 = int_to_ptr.hbm [resolvable:$true] %s218
          %221 = dma.vmem_to_hbm [thread:$0]  %s217, 128, %s219, %s203
        $region36: #{tpu_custom_call.1} parent=27 // pred_fallthru
          _
      $region28: #{tpu_custom_call.1} parent=5 // pred_fallthru
        _
      %p222 = scmp.le.s32.totalorder 2, %s14
      // Predicated region
      $region37: #{tpu_custom_call.1} parent=5 // pred_check
        %p223 = pneg %p222
      $region38: #{tpu_custom_call.1} parent=5 // pred_check_branch
        %225 = sbr.rel (%p223) target = $region40
      $region39: #{tpu_custom_call.1} parent=5 // pred_region
        %s226 = ssub.s32 %s14, 2
        // Predicated region
        $region41: #{tpu_custom_call.1} parent=39 // pred_check
          %p227 = pneg %p111
        $region42: #{tpu_custom_call.1} parent=39 // pred_check_branch
          %229 = sbr.rel (%p227) target = $region44
        $region43: #{tpu_custom_call.1} parent=39 // pred_region
          %s230 = sand.u32 %s96, 1
          %s231 = scalar_lea.sflag [#allocation4], %s230
          %s232 = sand.u32 %s96, 1
          %s233 = smul.addr %s232, 8
          %s234 = scalar_lea.vmem [#allocation5], %s233
          %236 = dma.done %s231, 128
        $region44: #{tpu_custom_call.1} parent=39 // pred_fallthru
          _
      $region40: #{tpu_custom_call.1} parent=5 // pred_fallthru
        _
    $region6: #{tpu_custom_call.1} parent=1 // loop_footer
      %s18 = sadd.s32 1, %s14
    $region7: #{tpu_custom_call.1} parent=1 // loop_footer_branch
      %13 = sbr.rel target = $region3
    $region8: #{tpu_custom_call.1} parent=1 // loop_exit
      _
    %237 = vsyncpa [#allocation3], 1
    %s238 = scalar_lea.sflag [#allocation3], 1
    %239 = vsyncpa %s238, 1
    %240 = vsyncpa [#allocation4], 1
    %s241 = scalar_lea.sflag [#allocation4], 1
    %242 = vsyncpa %s241, 1

</llo_original>
